<compile_context>
chip_gen: v6e
topology: v6e:2x2x1
jax: 0.10.0
libtpu: 0.0.40
codegen_flags: <defaults>
</compile_context>

<pallas_src>
import jax
import jax.numpy as jnp
from jax.experimental import pallas as pl
from jax.experimental.pallas import tpu as pltpu  # noqa: F401  (TPU backend)

BN_EPS = 1e-5
LANE = 128  # lane-dense padded feature width


# ---------------------------------------------------------------------------
# Fused Pallas kernel: all GIN layers + graph pooling in one call
# ---------------------------------------------------------------------------
def make_encoder_kernel(num_gin_layers):
    """Build a fused kernel for a fixed number of GIN layers.

    Ref order: adj, x, graph_pool, (w1, b1, w2, b2) * num_gin_layers,
               then outputs h_nodes, h_pooled.
    """

    def kernel(adj_ref, x_ref, gp_ref, *rest):
        w_refs = rest[: 4 * num_gin_layers]
        h_nodes_ref, h_pooled_ref = rest[4 * num_gin_layers:]

        adj = adj_ref[...]
        h = x_ref[...]
        inv_n = 1.0 / h.shape[0]

        def bn_relu(z):
            # Single reduce pass: sum and sum-of-squares (biased variance,
            # training-mode BatchNorm1d, gamma=1 / beta=0).
            s = jnp.sum(z, axis=0, keepdims=True)
            ss = jnp.sum(z * z, axis=0, keepdims=True)
            mu = s * inv_n
            var = ss * inv_n - mu * mu
            # Padded (all-zero) columns: mu = var = 0 -> output stays 0.
            return jnp.maximum((z - mu) * jax.lax.rsqrt(var + BN_EPS), 0.0)

        for layer in range(num_gin_layers):
            w1 = w_refs[4 * layer + 0][...]
            b1 = w_refs[4 * layer + 1][...]
            w2 = w_refs[4 * layer + 2][...]
            b2 = w_refs[4 * layer + 3][...]

            # Sum neighbor pooling (Adj block already contains self-loops).
            pooled = jnp.dot(adj, h, preferred_element_type=jnp.float32)
            # MLP hidden linear -> BN -> relu.
            z1 = jnp.dot(pooled, w1, preferred_element_type=jnp.float32) + b1
            a1 = bn_relu(z1)
            # MLP output linear -> outer GraphCNN BN -> relu.
            z2 = jnp.dot(a1, w2, preferred_element_type=jnp.float32) + b2
            h = bn_relu(z2)

        # Lane-dense [N, 128] node-feature output.
        h_nodes_ref[...] = h
        # Folded graph pooling: [B, N] x [N, 128] -> [B, 128].
        h_pooled_ref[...] = jnp.dot(gp_ref[...], h,
                                    preferred_element_type=jnp.float32)

    return kernel


# ---------------------------------------------------------------------------
# Wrapper: pad to lane-dense 128, single pallas_call, slice real columns back
# ---------------------------------------------------------------------------
def _full_spec(shape):
    # Block == full array extent (no grid).
    return pl.BlockSpec(shape, lambda: tuple(0 for _ in shape))


def _pad_last(a, target):
    pad = target - a.shape[-1]
    if pad <= 0:
        return a
    return jnp.pad(a, [(0, 0)] * (a.ndim - 1) + [(0, pad)])


def _pad2(a, rows, cols):
    return jnp.pad(a, ((0, rows - a.shape[0]), (0, cols - a.shape[1])))


@jax.jit
def encoder_forward(params, x, graph_pool, adj):
    """Encoder.forward(x, graph_pool, padded_nei, adj) -> (h_pooled, h_nodes).

    padded_nei is only used for neighbor_pooling_type == "max"; with "sum"
    pooling it is ignored, matching the reference module configuration.
    """
    n = x.shape[0]
    b = graph_pool.shape[0]
    hidden_dim = params[-1][2].shape[1]
    num_gin_layers = len(params)

    # Zero-pad every feature dimension to the 128-lane width.
    x_p = _pad_last(x, LANE)
    flat = []
    for (w1, b1, w2, b2) in params:
        flat += [
            _pad2(w1, LANE, LANE),
            _pad_last(b1, LANE),
            _pad2(w2, LANE, LANE),
            _pad_last(b2, LANE),
        ]

    in_arrays = [adj, x_p, graph_pool] + flat
    in_specs = [_full_spec(a.shape) for a in in_arrays]

    h_nodes_p, h_pooled_p = pl.pallas_call(
        make_encoder_kernel(num_gin_layers),
        out_shape=(
            jax.ShapeDtypeStruct((n, LANE), jnp.float32),
            jax.ShapeDtypeStruct((b, LANE), jnp.float32),
        ),
        in_specs=in_specs,
        out_specs=(_full_spec((n, LANE)), _full_spec((b, LANE))),
    )(*in_arrays)

    # Strip the zero padding to recover the module's [*, hidden_dim] outputs.
    return h_pooled_p[:, :hidden_dim], h_nodes_p[:, :hidden_dim]


# ---------------------------------------------------------------------------
# Pure-JAX reference for correctness check
# ---------------------------------------------------------------------------
def encoder_forward_ref(params, x, graph_pool, adj):
    h = x
    for (w1, b1, w2, b2) in params:
        pooled = adj @ h
        z1 = pooled @ w1 + b1
        mu1 = jnp.mean(z1, axis=0, keepdims=True)
        var1 = jnp.mean((z1 - mu1) ** 2, axis=0, keepdims=True)
        a1 = jnp.maximum((z1 - mu1) / jnp.sqrt(var1 + BN_EPS), 0.0)
        z2 = a1 @ w2 + b2
        mu2 = jnp.mean(z2, axis=0, keepdims=True)
        var2 = jnp.mean((z2 - mu2) ** 2, axis=0, keepdims=True)
        h = jnp.maximum((z2 - mu2) / jnp.sqrt(var2 + BN_EPS), 0.0)
    return graph_pool @ h, h


# ---------------------------------------------------------------------------
# Deterministic parameter init (synthetic; shapes follow GraphCNN/MLP __init__)
# ---------------------------------------------------------------------------
def init_params(key, num_layers, input_dim, hidden_dim):
    params = []
    for layer in range(num_layers - 1):
        in_dim = input_dim if layer == 0 else hidden_dim
        key, k1, k2, k3, k4 = jax.random.split(key, 5)
        w1 = jax.random.normal(k1, (in_dim, hidden_dim), jnp.float32) * (1.0 / jnp.sqrt(in_dim))
        b1 = jax.random.normal(k2, (1, hidden_dim), jnp.float32) * 0.1
        w2 = jax.random.normal(k3, (hidden_dim, hidden_dim), jnp.float32) * (1.0 / jnp.sqrt(hidden_dim))
        b2 = jax.random.normal(k4, (1, hidden_dim), jnp.float32) * 0.1
        params.append((w1, b1, w2, b2))
    return params


if __name__ == "__main__":
    # Small shapes consistent with the module's forward.
    NUM_LAYERS = 3        # => 2 GIN layers
    NUM_MLP_LAYERS = 2    # linear -> BN -> relu -> linear
    INPUT_DIM = 8
    HIDDEN_DIM = 32
    N_NODES = 16
    N_GRAPHS = 2

    key = jax.random.PRNGKey(0)
    key, kx, kadj = jax.random.split(key, 3)

    # Node features [N, input_dim].
    x = jax.random.normal(kx, (N_NODES, INPUT_DIM), jnp.float32)

    # Dense adjacency with self-loops (the PyTorch code builds an Adj_block
    # that already includes self connections).
    rand_adj = (jax.random.uniform(kadj, (N_NODES, N_NODES)) < 0.3).astype(jnp.float32)
    adj = jnp.clip(rand_adj + rand_adj.T + jnp.eye(N_NODES, dtype=jnp.float32), 0.0, 1.0)

    # Average graph-pooling matrix [B, N]: graph 0 owns nodes 0..7, graph 1 owns 8..15.
    nodes_per_graph = N_NODES // N_GRAPHS
    graph_pool = jnp.zeros((N_GRAPHS, N_NODES), jnp.float32)
    for g in range(N_GRAPHS):
        graph_pool = graph_pool.at[g, g * nodes_per_graph:(g + 1) * nodes_per_graph].set(
            1.0 / nodes_per_graph)

    # padded_nei is unused for sum-pooling (kept for signature parity).
    padded_nei = None

    params = init_params(key, NUM_LAYERS, INPUT_DIM, HIDDEN_DIM)

    h_pooled, h_nodes = encoder_forward(params, x, graph_pool, adj)
    jax.block_until_ready((h_pooled, h_nodes))

    h_pooled_ref, h_nodes_ref = encoder_forward_ref(params, x, graph_pool, adj)
    assert h_nodes.shape == (N_NODES, HIDDEN_DIM)
    assert h_pooled.shape == (N_GRAPHS, HIDDEN_DIM)
    assert jnp.allclose(h_nodes, h_nodes_ref, atol=1e-4, rtol=1e-4)
    assert jnp.allclose(h_pooled, h_pooled_ref, atol=1e-4, rtol=1e-4)

    print("KERNEL_OK")
</pallas_src>

<mosaic_0001>
module attributes {stable_mosaic.version = 11 : i64} {
  func.func @kernel(%arg0: memref<16x16xf32, #tpu.memory_space<vmem>>, %arg1: memref<16x128xf32, #tpu.memory_space<vmem>>, %arg2: memref<2x16xf32, #tpu.memory_space<vmem>>, %arg3: memref<128x128xf32, #tpu.memory_space<vmem>>, %arg4: memref<1x128xf32, #tpu.memory_space<vmem>>, %arg5: memref<128x128xf32, #tpu.memory_space<vmem>>, %arg6: memref<1x128xf32, #tpu.memory_space<vmem>>, %arg7: memref<128x128xf32, #tpu.memory_space<vmem>>, %arg8: memref<1x128xf32, #tpu.memory_space<vmem>>, %arg9: memref<128x128xf32, #tpu.memory_space<vmem>>, %arg10: memref<1x128xf32, #tpu.memory_space<vmem>>, %arg11: memref<16x128xf32, #tpu.memory_space<vmem>>, %arg12: memref<2x128xf32, #tpu.memory_space<vmem>>) attributes {dimension_semantics = [], scalar_prefetch = 0 : i64, scratch_operands = 0 : i64, tpu.core_type = #tpu.core_type<tc>} {
    %c0 = arith.constant 0 : index
    %c0_0 = arith.constant 0 : index
    %0 = vector.load %arg0[%c0, %c0_0] : memref<16x16xf32, #tpu.memory_space<vmem>>, vector<16x16xf32>
    %c0_1 = arith.constant 0 : index
    %c0_2 = arith.constant 0 : index
    %1 = vector.load %arg1[%c0_1, %c0_2] : memref<16x128xf32, #tpu.memory_space<vmem>>, vector<16x128xf32>
    %c0_3 = arith.constant 0 : index
    %c0_4 = arith.constant 0 : index
    %2 = vector.load %arg3[%c0_3, %c0_4] : memref<128x128xf32, #tpu.memory_space<vmem>>, vector<128x128xf32>
    %c0_5 = arith.constant 0 : index
    %c0_6 = arith.constant 0 : index
    %3 = vector.load %arg4[%c0_5, %c0_6] : memref<1x128xf32, #tpu.memory_space<vmem>>, vector<1x128xf32>
    %c0_7 = arith.constant 0 : index
    %c0_8 = arith.constant 0 : index
    %4 = vector.load %arg5[%c0_7, %c0_8] : memref<128x128xf32, #tpu.memory_space<vmem>>, vector<128x128xf32>
    %c0_9 = arith.constant 0 : index
    %c0_10 = arith.constant 0 : index
    %5 = vector.load %arg6[%c0_9, %c0_10] : memref<1x128xf32, #tpu.memory_space<vmem>>, vector<1x128xf32>
    %cst = arith.constant dense<0.000000e+00> : vector<16x128xf32>
    %6 = tpu.matmul %0, %1, %cst {dimension_numbers = #tpu.dot_dimension_numbers<[1], [0], [0], [1], [0, 0, 1, 1], [], []>} : vector<16x16xf32>, vector<16x128xf32>, vector<16x128xf32> -> vector<16x128xf32>
    %cst_11 = arith.constant dense<0.000000e+00> : vector<16x128xf32>
    %7 = tpu.matmul %6, %2, %cst_11 {dimension_numbers = #tpu.dot_dimension_numbers<[1], [0], [0], [1], [0, 0, 1, 1], [], []>} : vector<16x128xf32>, vector<128x128xf32>, vector<16x128xf32> -> vector<16x128xf32>
    %8 = vector.broadcast %3 : vector<1x128xf32> to vector<16x128xf32>
    %9 = arith.addf %7, %8 : vector<16x128xf32>
    %cst_12 = arith.constant dense<0.000000e+00> : vector<128xf32>
    %10 = vector.multi_reduction <add>, %9, %cst_12 [0] : vector<16x128xf32> to vector<128xf32>
    %11 = vector.shape_cast %10 : vector<128xf32> to vector<1x128xf32>
    %12 = arith.mulf %9, %9 : vector<16x128xf32>
    %cst_13 = arith.constant dense<0.000000e+00> : vector<128xf32>
    %13 = vector.multi_reduction <add>, %12, %cst_13 [0] : vector<16x128xf32> to vector<128xf32>
    %14 = vector.shape_cast %13 : vector<128xf32> to vector<1x128xf32>
    %cst_14 = arith.constant 6.250000e-02 : f32
    %15 = vector.broadcast %cst_14 : f32 to vector<1x128xf32>
    %16 = arith.mulf %11, %15 : vector<1x128xf32>
    %cst_15 = arith.constant 6.250000e-02 : f32
    %17 = vector.broadcast %cst_15 : f32 to vector<1x128xf32>
    %18 = arith.mulf %14, %17 : vector<1x128xf32>
    %19 = arith.mulf %16, %16 : vector<1x128xf32>
    %20 = arith.subf %18, %19 : vector<1x128xf32>
    %21 = vector.broadcast %16 : vector<1x128xf32> to vector<16x128xf32>
    %22 = arith.subf %9, %21 : vector<16x128xf32>
    %cst_16 = arith.constant 9.99999974E-6 : f32
    %23 = vector.broadcast %cst_16 : f32 to vector<1x128xf32>
    %24 = arith.addf %20, %23 : vector<1x128xf32>
    %25 = math.rsqrt %24 : vector<1x128xf32>
    %26 = vector.broadcast %25 : vector<1x128xf32> to vector<16x128xf32>
    %27 = arith.mulf %22, %26 : vector<16x128xf32>
    %cst_17 = arith.constant 0.000000e+00 : f32
    %28 = vector.broadcast %cst_17 : f32 to vector<16x128xf32>
    %29 = arith.maximumf %27, %28 : vector<16x128xf32>
    %cst_18 = arith.constant dense<0.000000e+00> : vector<16x128xf32>
    %30 = tpu.matmul %29, %4, %cst_18 {dimension_numbers = #tpu.dot_dimension_numbers<[1], [0], [0], [1], [0, 0, 1, 1], [], []>} : vector<16x128xf32>, vector<128x128xf32>, vector<16x128xf32> -> vector<16x128xf32>
    %31 = vector.broadcast %5 : vector<1x128xf32> to vector<16x128xf32>
    %32 = arith.addf %30, %31 : vector<16x128xf32>
    %cst_19 = arith.constant dense<0.000000e+00> : vector<128xf32>
    %33 = vector.multi_reduction <add>, %32, %cst_19 [0] : vector<16x128xf32> to vector<128xf32>
    %34 = vector.shape_cast %33 : vector<128xf32> to vector<1x128xf32>
    %35 = arith.mulf %32, %32 : vector<16x128xf32>
    %cst_20 = arith.constant dense<0.000000e+00> : vector<128xf32>
    %36 = vector.multi_reduction <add>, %35, %cst_20 [0] : vector<16x128xf32> to vector<128xf32>
    %37 = vector.shape_cast %36 : vector<128xf32> to vector<1x128xf32>
    %cst_21 = arith.constant 6.250000e-02 : f32
    %38 = vector.broadcast %cst_21 : f32 to vector<1x128xf32>
    %39 = arith.mulf %34, %38 : vector<1x128xf32>
    %cst_22 = arith.constant 6.250000e-02 : f32
    %40 = vector.broadcast %cst_22 : f32 to vector<1x128xf32>
    %41 = arith.mulf %37, %40 : vector<1x128xf32>
    %42 = arith.mulf %39, %39 : vector<1x128xf32>
    %43 = arith.subf %41, %42 : vector<1x128xf32>
    %44 = vector.broadcast %39 : vector<1x128xf32> to vector<16x128xf32>
    %45 = arith.subf %32, %44 : vector<16x128xf32>
    %cst_23 = arith.constant 9.99999974E-6 : f32
    %46 = vector.broadcast %cst_23 : f32 to vector<1x128xf32>
    %47 = arith.addf %43, %46 : vector<1x128xf32>
    %48 = math.rsqrt %47 : vector<1x128xf32>
    %49 = vector.broadcast %48 : vector<1x128xf32> to vector<16x128xf32>
    %50 = arith.mulf %45, %49 : vector<16x128xf32>
    %cst_24 = arith.constant 0.000000e+00 : f32
    %51 = vector.broadcast %cst_24 : f32 to vector<16x128xf32>
    %52 = arith.maximumf %50, %51 : vector<16x128xf32>
    %c0_25 = arith.constant 0 : index
    %c0_26 = arith.constant 0 : index
    %53 = vector.load %arg7[%c0_25, %c0_26] : memref<128x128xf32, #tpu.memory_space<vmem>>, vector<128x128xf32>
    %c0_27 = arith.constant 0 : index
    %c0_28 = arith.constant 0 : index
    %54 = vector.load %arg8[%c0_27, %c0_28] : memref<1x128xf32, #tpu.memory_space<vmem>>, vector<1x128xf32>
    %c0_29 = arith.constant 0 : index
    %c0_30 = arith.constant 0 : index
    %55 = vector.load %arg9[%c0_29, %c0_30] : memref<128x128xf32, #tpu.memory_space<vmem>>, vector<128x128xf32>
    %c0_31 = arith.constant 0 : index
    %c0_32 = arith.constant 0 : index
    %56 = vector.load %arg10[%c0_31, %c0_32] : memref<1x128xf32, #tpu.memory_space<vmem>>, vector<1x128xf32>
    %cst_33 = arith.constant dense<0.000000e+00> : vector<16x128xf32>
    %57 = tpu.matmul %0, %52, %cst_33 {dimension_numbers = #tpu.dot_dimension_numbers<[1], [0], [0], [1], [0, 0, 1, 1], [], []>} : vector<16x16xf32>, vector<16x128xf32>, vector<16x128xf32> -> vector<16x128xf32>
    %cst_34 = arith.constant dense<0.000000e+00> : vector<16x128xf32>
    %58 = tpu.matmul %57, %53, %cst_34 {dimension_numbers = #tpu.dot_dimension_numbers<[1], [0], [0], [1], [0, 0, 1, 1], [], []>} : vector<16x128xf32>, vector<128x128xf32>, vector<16x128xf32> -> vector<16x128xf32>
    %59 = vector.broadcast %54 : vector<1x128xf32> to vector<16x128xf32>
    %60 = arith.addf %58, %59 : vector<16x128xf32>
    %cst_35 = arith.constant dense<0.000000e+00> : vector<128xf32>
    %61 = vector.multi_reduction <add>, %60, %cst_35 [0] : vector<16x128xf32> to vector<128xf32>
    %62 = vector.shape_cast %61 : vector<128xf32> to vector<1x128xf32>
    %63 = arith.mulf %60, %60 : vector<16x128xf32>
    %cst_36 = arith.constant dense<0.000000e+00> : vector<128xf32>
    %64 = vector.multi_reduction <add>, %63, %cst_36 [0] : vector<16x128xf32> to vector<128xf32>
    %65 = vector.shape_cast %64 : vector<128xf32> to vector<1x128xf32>
    %cst_37 = arith.constant 6.250000e-02 : f32
    %66 = vector.broadcast %cst_37 : f32 to vector<1x128xf32>
    %67 = arith.mulf %62, %66 : vector<1x128xf32>
    %cst_38 = arith.constant 6.250000e-02 : f32
    %68 = vector.broadcast %cst_38 : f32 to vector<1x128xf32>
    %69 = arith.mulf %65, %68 : vector<1x128xf32>
    %70 = arith.mulf %67, %67 : vector<1x128xf32>
    %71 = arith.subf %69, %70 : vector<1x128xf32>
    %72 = vector.broadcast %67 : vector<1x128xf32> to vector<16x128xf32>
    %73 = arith.subf %60, %72 : vector<16x128xf32>
    %cst_39 = arith.constant 9.99999974E-6 : f32
    %74 = vector.broadcast %cst_39 : f32 to vector<1x128xf32>
    %75 = arith.addf %71, %74 : vector<1x128xf32>
    %76 = math.rsqrt %75 : vector<1x128xf32>
    %77 = vector.broadcast %76 : vector<1x128xf32> to vector<16x128xf32>
    %78 = arith.mulf %73, %77 : vector<16x128xf32>
    %cst_40 = arith.constant 0.000000e+00 : f32
    %79 = vector.broadcast %cst_40 : f32 to vector<16x128xf32>
    %80 = arith.maximumf %78, %79 : vector<16x128xf32>
    %cst_41 = arith.constant dense<0.000000e+00> : vector<16x128xf32>
    %81 = tpu.matmul %80, %55, %cst_41 {dimension_numbers = #tpu.dot_dimension_numbers<[1], [0], [0], [1], [0, 0, 1, 1], [], []>} : vector<16x128xf32>, vector<128x128xf32>, vector<16x128xf32> -> vector<16x128xf32>
    %82 = vector.broadcast %56 : vector<1x128xf32> to vector<16x128xf32>
    %83 = arith.addf %81, %82 : vector<16x128xf32>
    %cst_42 = arith.constant dense<0.000000e+00> : vector<128xf32>
    %84 = vector.multi_reduction <add>, %83, %cst_42 [0] : vector<16x128xf32> to vector<128xf32>
    %85 = vector.shape_cast %84 : vector<128xf32> to vector<1x128xf32>
    %86 = arith.mulf %83, %83 : vector<16x128xf32>
    %cst_43 = arith.constant dense<0.000000e+00> : vector<128xf32>
    %87 = vector.multi_reduction <add>, %86, %cst_43 [0] : vector<16x128xf32> to vector<128xf32>
    %88 = vector.shape_cast %87 : vector<128xf32> to vector<1x128xf32>
    %cst_44 = arith.constant 6.250000e-02 : f32
    %89 = vector.broadcast %cst_44 : f32 to vector<1x128xf32>
    %90 = arith.mulf %85, %89 : vector<1x128xf32>
    %cst_45 = arith.constant 6.250000e-02 : f32
    %91 = vector.broadcast %cst_45 : f32 to vector<1x128xf32>
    %92 = arith.mulf %88, %91 : vector<1x128xf32>
    %93 = arith.mulf %90, %90 : vector<1x128xf32>
    %94 = arith.subf %92, %93 : vector<1x128xf32>
    %95 = vector.broadcast %90 : vector<1x128xf32> to vector<16x128xf32>
    %96 = arith.subf %83, %95 : vector<16x128xf32>
    %cst_46 = arith.constant 9.99999974E-6 : f32
    %97 = vector.broadcast %cst_46 : f32 to vector<1x128xf32>
    %98 = arith.addf %94, %97 : vector<1x128xf32>
    %99 = math.rsqrt %98 : vector<1x128xf32>
    %100 = vector.broadcast %99 : vector<1x128xf32> to vector<16x128xf32>
    %101 = arith.mulf %96, %100 : vector<16x128xf32>
    %cst_47 = arith.constant 0.000000e+00 : f32
    %102 = vector.broadcast %cst_47 : f32 to vector<16x128xf32>
    %103 = arith.maximumf %101, %102 : vector<16x128xf32>
    %c0_48 = arith.constant 0 : index
    %c0_49 = arith.constant 0 : index
    %104 = vector.load %arg11[%c0_48, %c0_49] : memref<16x128xf32, #tpu.memory_space<vmem>>, vector<16x128xf32>
    tpu.vector_store %arg11[%c0_48, %c0_49], %103 {strides = array<i32>} : memref<16x128xf32, #tpu.memory_space<vmem>>, vector<16x128xf32>,
    %c0_50 = arith.constant 0 : index
    %c0_51 = arith.constant 0 : index
    %105 = vector.load %arg2[%c0_50, %c0_51] : memref<2x16xf32, #tpu.memory_space<vmem>>, vector<2x16xf32>
    %cst_52 = arith.constant dense<0.000000e+00> : vector<2x128xf32>
    %106 = tpu.matmul %105, %103, %cst_52 {dimension_numbers = #tpu.dot_dimension_numbers<[1], [0], [0], [1], [0, 0, 1, 1], [], []>} : vector<2x16xf32>, vector<16x128xf32>, vector<2x128xf32> -> vector<2x128xf32>
    %c0_53 = arith.constant 0 : index
    %c0_54 = arith.constant 0 : index
    %107 = vector.load %arg12[%c0_53, %c0_54] : memref<2x128xf32, #tpu.memory_space<vmem>>, vector<2x128xf32>
    tpu.vector_store %arg12[%c0_53, %c0_54], %106 {strides = array<i32>} : memref<2x128xf32, #tpu.memory_space<vmem>>, vector<2x128xf32>,
    return
  }
}

</mosaic_0001>

<llo_original>
// kernel: encoder_forward.1
$region0: #{encoder_forward.1}
  #allocation0 [shape = 'u32[]', space=smem, size = 0x4, offset = 0x4, fixed_abs, tag = 'smem constant byte address 0x4 - core index']
  #allocation1 [shape = 'u32[144,128]{1,0:T(1,128)}', space=vmem, size = 0x12000, scoped, tag = 'internal scratch']
  %s0 = inlined_call_operand.vmem [shape: f32[16,16], index: 0, kind: input, shape index: {}]
  %s1 = inlined_call_operand.vmem [shape: f32[16,128], index: 1, kind: input, shape index: {}]
  %s2 = inlined_call_operand.vmem [shape: f32[2,16], index: 2, kind: input, shape index: {}]
  %s3 = inlined_call_operand.vmem [shape: f32[128,128], index: 3, kind: input, shape index: {}]
  %s4 = inlined_call_operand.vmem [shape: f32[1,128], index: 4, kind: input, shape index: {}]
  %s5 = inlined_call_operand.vmem [shape: f32[128,128], index: 5, kind: input, shape index: {}]
  %s6 = inlined_call_operand.vmem [shape: f32[1,128], index: 6, kind: input, shape index: {}]
  %s7 = inlined_call_operand.vmem [shape: f32[128,128], index: 7, kind: input, shape index: {}]
  %s8 = inlined_call_operand.vmem [shape: f32[1,128], index: 8, kind: input, shape index: {}]
  %s9 = inlined_call_operand.vmem [shape: f32[128,128], index: 9, kind: input, shape index: {}]
  %s10 = inlined_call_operand.vmem [shape: f32[1,128], index: 10, kind: input, shape index: {}]
  %s11 = inlined_call_operand.hbm [shape: f32[16,128], index: 11, kind: output, shape index: {0}]
  %s12 = inlined_call_operand.hbm [shape: f32[2,128], index: 12, kind: output, shape index: {1}]
  %13 = xla_tuple %s11, %s12
  %s14 = sld [smem:[#allocation0]]
  $region62: #{encoder_forward.1} parent=0
    _
  %s16 = ssub.s32 1, %s14
  %s17 = scalar_select 0, %s16, %s14
  $region1: #{encoder_forward.1} parent=0
    #allocation2 [shape = 'u8[8192]{0}', space=vmem, size = 0x2000, scoped, tag = 'output window, operand 0, single buffered']
    #allocation3 [shape = 's32[1]{0}', space=sflag, size = 0x4, scoped, tag = 'scoped memory for encoder_forward.1']
    #allocation4 [shape = 'u8[1024]{0}', space=vmem, size = 0x400, scoped, tag = 'output window, operand 1, single buffered']
    #allocation5 [shape = 's32[1]{0}', space=sflag, size = 0x4, scoped, tag = 'scoped memory for encoder_forward.1']
    %18 = vsyncpa [#allocation3], 0
    %19 = vsyncpa [#allocation5], 0
    // Predicated region
    $region2: #{encoder_forward.1} parent=1 // pred_check
      _
    $region3: #{encoder_forward.1} parent=1 // pred_check_branch
      %21 = sbr.rel (0) target = $region5
    $region4: #{encoder_forward.1} parent=1 // pred_region
      _
    $region5: #{encoder_forward.1} parent=1 // pred_fallthru
      _
    // Predicated region
    $region6: #{encoder_forward.1} parent=1 // pred_check
      _
    $region7: #{encoder_forward.1} parent=1 // pred_check_branch
      %23 = sbr.rel (0) target = $region9
    $region8: #{encoder_forward.1} parent=1 // pred_region
      _
    $region9: #{encoder_forward.1} parent=1 // pred_fallthru
      _
    // Predicated region
    $region10: #{encoder_forward.1} parent=1 // pred_check
      _
    $region11: #{encoder_forward.1} parent=1 // pred_check_branch
      %25 = sbr.rel (0) target = $region13
    $region12: #{encoder_forward.1} parent=1 // pred_region
      _
    $region13: #{encoder_forward.1} parent=1 // pred_fallthru
      _
    // Predicated region
    $region14: #{encoder_forward.1} parent=1 // pred_check
      _
    $region15: #{encoder_forward.1} parent=1 // pred_check_branch
      %27 = sbr.rel (0) target = $region17
    $region16: #{encoder_forward.1} parent=1 // pred_region
      _
    $region17: #{encoder_forward.1} parent=1 // pred_fallthru
      _
    // Predicated region
    $region18: #{encoder_forward.1} parent=1 // pred_check
      _
    $region19: #{encoder_forward.1} parent=1 // pred_check_branch
      %29 = sbr.rel (0) target = $region21
    $region20: #{encoder_forward.1} parent=1 // pred_region
      _
    $region21: #{encoder_forward.1} parent=1 // pred_fallthru
      _
    // Predicated region
    $region22: #{encoder_forward.1} parent=1 // pred_check
      _
    $region23: #{encoder_forward.1} parent=1 // pred_check_branch
      %31 = sbr.rel (0) target = $region25
    $region24: #{encoder_forward.1} parent=1 // pred_region
      _
    $region25: #{encoder_forward.1} parent=1 // pred_fallthru
      _
    // Predicated region
    $region26: #{encoder_forward.1} parent=1 // pred_check
      _
    $region27: #{encoder_forward.1} parent=1 // pred_check_branch
      %33 = sbr.rel (0) target = $region29
    $region28: #{encoder_forward.1} parent=1 // pred_region
      _
    $region29: #{encoder_forward.1} parent=1 // pred_fallthru
      _
    // Predicated region
    $region30: #{encoder_forward.1} parent=1 // pred_check
      _
    $region31: #{encoder_forward.1} parent=1 // pred_check_branch
      %35 = sbr.rel (0) target = $region33
    $region32: #{encoder_forward.1} parent=1 // pred_region
      _
    $region33: #{encoder_forward.1} parent=1 // pred_fallthru
      _
    // Predicated region
    $region34: #{encoder_forward.1} parent=1 // pred_check
      _
    $region35: #{encoder_forward.1} parent=1 // pred_check_branch
      %37 = sbr.rel (0) target = $region37
    $region36: #{encoder_forward.1} parent=1 // pred_region
      _
    $region37: #{encoder_forward.1} parent=1 // pred_fallthru
      _
    // Predicated region
    $region38: #{encoder_forward.1} parent=1 // pred_check
      _
    $region39: #{encoder_forward.1} parent=1 // pred_check_branch
      %39 = sbr.rel (0) target = $region41
    $region40: #{encoder_forward.1} parent=1 // pred_region
      _
    $region41: #{encoder_forward.1} parent=1 // pred_fallthru
      _
    // Predicated region
    $region42: #{encoder_forward.1} parent=1 // pred_check
      _
    $region43: #{encoder_forward.1} parent=1 // pred_check_branch
      %41 = sbr.rel (0) target = $region45
    $region44: #{encoder_forward.1} parent=1 // pred_region
      _
    $region45: #{encoder_forward.1} parent=1 // pred_fallthru
      _
    %v42 = vld [vmem:[%s0] sm:$0xff]
    %v43 = vld [vmem:[%s0 + $0x8] sm:$0xff]
    %v44 = vld [vmem:[%s1] sm:$0xff]
    %v45 = vld [vmem:[%s1 + $0x8] sm:$0xff]
    %v46 = vld [vmem:[%s3] sm:$0xff]
    %v47 = vld [vmem:[%s3 + $0x8] sm:$0xff]
    %v48 = vld [vmem:[%s3 + $0x10] sm:$0xff]
    %v49 = vld [vmem:[%s3 + $0x18] sm:$0xff]
    %v50 = vld [vmem:[%s3 + $0x20] sm:$0xff]
    %v51 = vld [vmem:[%s3 + $0x28] sm:$0xff]
    %v52 = vld [vmem:[%s3 + $0x30] sm:$0xff]
    %v53 = vld [vmem:[%s3 + $0x38] sm:$0xff]
    %v54 = vld [vmem:[%s3 + $0x40] sm:$0xff]
    %v55 = vld [vmem:[%s3 + $0x48] sm:$0xff]
    %v56 = vld [vmem:[%s3 + $0x50] sm:$0xff]
    %v57 = vld [vmem:[%s3 + $0x58] sm:$0xff]
    %v58 = vld [vmem:[%s3 + $0x60] sm:$0xff]
    %v59 = vld [vmem:[%s3 + $0x68] sm:$0xff]
    %v60 = vld [vmem:[%s3 + $0x70] sm:$0xff]
    %v61 = vld [vmem:[%s3 + $0x78] sm:$0xff]
    %v62 = vld [vmem:[%s4] sm:$0x1]
    %v63 = vld [vmem:[%s5] sm:$0xff]
    %v64 = vld [vmem:[%s5 + $0x8] sm:$0xff]
    %v65 = vld [vmem:[%s5 + $0x10] sm:$0xff]
    %v66 = vld [vmem:[%s5 + $0x18] sm:$0xff]
    %v67 = vld [vmem:[%s5 + $0x20] sm:$0xff]
    %v68 = vld [vmem:[%s5 + $0x28] sm:$0xff]
    %v69 = vld [vmem:[%s5 + $0x30] sm:$0xff]
    %v70 = vld [vmem:[%s5 + $0x38] sm:$0xff]
    %v71 = vld [vmem:[%s5 + $0x40] sm:$0xff]
    %v72 = vld [vmem:[%s5 + $0x48] sm:$0xff]
    %v73 = vld [vmem:[%s5 + $0x50] sm:$0xff]
    %v74 = vld [vmem:[%s5 + $0x58] sm:$0xff]
    %v75 = vld [vmem:[%s5 + $0x60] sm:$0xff]
    %v76 = vld [vmem:[%s5 + $0x68] sm:$0xff]
    %v77 = vld [vmem:[%s5 + $0x70] sm:$0xff]
    %v78 = vld [vmem:[%s5 + $0x78] sm:$0xff]
    %v79 = vld [vmem:[%s6] sm:$0x1]
    %vm80 = vcmask 130048
    %v82 = vsel %vm80, %v42, 0
    %v85 = vsel %vm80, %v43, 0
    %87 = vmatprep.subr.mxu0 0.0
    %88 = vmatpush1.msra.mxu0 0.0
    %89 = vmatprep.subr.mxu0 0.0
    %90 = vmatpush1.msra.mxu0 0.0
    %91 = vmatprep.subr.mxu0 0.0
    %92 = vmatpush1.msra.mxu0 0.0
    %93 = vmatprep.subr.mxu0 0.0
    %94 = vmatpush1.msra.mxu0 0.0
    %95 = vmatprep.subr.mxu0 0.0
    %96 = vmatpush1.msra.mxu0 0.0
    %97 = vmatprep.subr.mxu0 0.0
    %98 = vmatpush1.msra.mxu0 0.0
    %99 = vmatprep.subr.mxu0 0.0
    %100 = vmatpush1.msra.mxu0 0.0
    %101 = vmatprep.subr.mxu0 0.0
    %102 = vmatpush1.msra.mxu0 0.0
    %103 = vmatprep.subr.mxu0 0.0
    %104 = vmatpush1.msra.mxu0 0.0
    %105 = vmatprep.subr.mxu0 0.0
    %106 = vmatpush1.msra.mxu0 0.0
    %107 = vmatprep.subr.mxu0 0.0
    %108 = vmatpush1.msra.mxu0 0.0
    %109 = vmatprep.subr.mxu0 0.0
    %110 = vmatpush1.msra.mxu0 0.0
    %111 = vmatprep.subr.mxu0 0.0
    %112 = vmatpush1.msra.mxu0 0.0
    %113 = vmatprep.subr.mxu0 0.0
    %114 = vmatpush1.msra.mxu0 0.0
    %115 = vmatprep.subr.mxu0 0.0
    %116 = vmatpush1.msra.mxu0 %v45
    %117 = vmatprep.subr.mxu0 0.0
    %118 = vmatpush1.msra.mxu0 %v44
    %119 = vmatprep.subr.mxu0 0.0
    %120 = vmatpush2.msra.mxu0 0.0
    %121 = vmatprep.subr.mxu0 0.0
    %122 = vmatpush2.msra.mxu0 0.0
    %123 = vmatprep.subr.mxu0 0.0
    %124 = vmatpush2.msra.mxu0 0.0
    %125 = vmatprep.subr.mxu0 0.0
    %126 = vmatpush2.msra.mxu0 0.0
    %127 = vmatprep.subr.mxu0 0.0
    %128 = vmatpush2.msra.mxu0 0.0
    %129 = vmatprep.subr.mxu0 0.0
    %130 = vmatpush2.msra.mxu0 0.0
    %131 = vmatprep.subr.mxu0 0.0
    %132 = vmatpush2.msra.mxu0 0.0
    %133 = vmatprep.subr.mxu0 0.0
    %134 = vmatpush2.msra.mxu0 0.0
    %135 = vmatprep.subr.mxu0 0.0
    %136 = vmatpush2.msra.mxu0 0.0
    %137 = vmatprep.subr.mxu0 0.0
    %138 = vmatpush2.msra.mxu0 0.0
    %139 = vmatprep.subr.mxu0 0.0
    %140 = vmatpush2.msra.mxu0 0.0
    %141 = vmatprep.subr.mxu0 0.0
    %142 = vmatpush2.msra.mxu0 0.0
    %143 = vmatprep.subr.mxu0 0.0
    %144 = vmatpush2.msra.mxu0 0.0
    %145 = vmatprep.subr.mxu0 0.0
    %146 = vmatpush2.msra.mxu0 0.0
    %147 = vmatprep.subr.mxu0 0.0
    %148 = vmatpush2.msra.mxu0 0.0
    %149 = vmatprep.subr.mxu0 0.0
    %150 = vmatpush2.msra.mxu0 0.0
    %151 = vmatprep.mubr.f32.mxu0 0.0
    %152 = vmatmul.mubr.f32.gmra.mxu0 %v82
    %v153 = vpop.f32.mrf.mxu0
    %v154 = vadd.f32 0.0, %v153
    %v155 = vpop.f32.mrf.mxu0
    %156 = vmatprep.mubr.f32.mxu0 0.0
    %157 = vmatmul.mubr.f32.gmra.mxu0 %v85
    %v158 = vpop.f32.mrf.mxu0
    %v159 = vadd.f32 0.0, %v158
    %v160 = vpop.f32.mrf.mxu0
    %161 = vdwg.mxu0
    %v163 = vlaneseq
    %v164 = vshrl.u32 %v163, 7
    %v165 = vsub.s32 0, %v164
    %v166 = vrot.slane %v62, %v165
    %168 = vmatprep.subr.mxu0 0.0
    %169 = vmatpush1.msra.mxu0 %v61
    %170 = vmatprep.subr.mxu0 0.0
    %171 = vmatpush1.msra.mxu0 %v60
    %172 = vmatprep.subr.mxu0 0.0
    %173 = vmatpush1.msra.mxu0 %v59
    %174 = vmatprep.subr.mxu0 0.0
    %175 = vmatpush1.msra.mxu0 %v58
    %176 = vmatprep.subr.mxu0 0.0
    %177 = vmatpush1.msra.mxu0 %v57
    %178 = vmatprep.subr.mxu0 0.0
    %179 = vmatpush1.msra.mxu0 %v56
    %180 = vmatprep.subr.mxu0 0.0
    %181 = vmatpush1.msra.mxu0 %v55
    %182 = vmatprep.subr.mxu0 0.0
    %183 = vmatpush1.msra.mxu0 %v54
    %184 = vmatprep.subr.mxu0 0.0
    %185 = vmatpush1.msra.mxu0 %v53
    %186 = vmatprep.subr.mxu0 0.0
    %187 = vmatpush1.msra.mxu0 %v52
    %188 = vmatprep.subr.mxu0 0.0
    %189 = vmatpush1.msra.mxu0 %v51
    %190 = vmatprep.subr.mxu0 0.0
    %191 = vmatpush1.msra.mxu0 %v50
    %192 = vmatprep.subr.mxu0 0.0
    %193 = vmatpush1.msra.mxu0 %v49
    %194 = vmatprep.subr.mxu0 0.0
    %195 = vmatpush1.msra.mxu0 %v48
    %196 = vmatprep.subr.mxu0 0.0
    %197 = vmatpush1.msra.mxu0 %v47
    %198 = vmatprep.subr.mxu0 0.0
    %199 = vmatpush1.msra.mxu0 %v46
    %200 = vmatprep.subr.mxu0 0.0
    %201 = vmatpush2.msra.mxu0 0.0
    %202 = vmatprep.subr.mxu0 0.0
    %203 = vmatpush2.msra.mxu0 0.0
    %204 = vmatprep.subr.mxu0 0.0
    %205 = vmatpush2.msra.mxu0 0.0
    %206 = vmatprep.subr.mxu0 0.0
    %207 = vmatpush2.msra.mxu0 0.0
    %208 = vmatprep.subr.mxu0 0.0
    %209 = vmatpush2.msra.mxu0 0.0
    %210 = vmatprep.subr.mxu0 0.0
    %211 = vmatpush2.msra.mxu0 0.0
    %212 = vmatprep.subr.mxu0 0.0
    %213 = vmatpush2.msra.mxu0 0.0
    %214 = vmatprep.subr.mxu0 0.0
    %215 = vmatpush2.msra.mxu0 0.0
    %216 = vmatprep.subr.mxu0 0.0
    %217 = vmatpush2.msra.mxu0 0.0
    %218 = vmatprep.subr.mxu0 0.0
    %219 = vmatpush2.msra.mxu0 0.0
    %220 = vmatprep.subr.mxu0 0.0
    %221 = vmatpush2.msra.mxu0 0.0
    %222 = vmatprep.subr.mxu0 0.0
    %223 = vmatpush2.msra.mxu0 0.0
    %224 = vmatprep.subr.mxu0 0.0
    %225 = vmatpush2.msra.mxu0 0.0
    %226 = vmatprep.subr.mxu0 0.0
    %227 = vmatpush2.msra.mxu0 0.0
    %228 = vmatprep.subr.mxu0 0.0
    %229 = vmatpush2.msra.mxu0 0.0
    %230 = vmatprep.subr.mxu0 0.0
    %231 = vmatpush2.msra.mxu0 0.0
    %232 = vmatprep.mubr.f32.mxu0 0.0
    %233 = vmatmul.mubr.f32.gmra.mxu0 %v154
    %v234 = vpop.f32.mrf.mxu0
    %v235 = vadd.f32 %v166, %v234
    %v236 = vpop.f32.mrf.mxu0
    %237 = vmatprep.mubr.f32.mxu0 0.0
    %238 = vmatmul.mubr.f32.gmra.mxu0 %v159
    %v239 = vpop.f32.mrf.mxu0
    %v240 = vadd.f32 %v166, %v239
    %v241 = vpop.f32.mrf.mxu0
    %242 = vdwg.mxu0
    %v243 = vadd.f32 %v235, %v240
    %v244 = vrot.slane %v243, 4
    %v245 = vadd.f32 %v243, %v244
    %v246 = vrot.slane %v245, 2
    %v247 = vadd.f32 %v245, %v246
    %v248 = vrot.slane %v247, 1
    %v249 = vadd.f32 %v247, %v248
    %v250 = vmul.f32 %v235, %v235
    %v251 = vmul.f32 %v240, %v240
    %v252 = vadd.f32 %v250, %v251
    %v253 = vrot.slane %v252, 4
    %v254 = vadd.f32 %v252, %v253
    %v255 = vrot.slane %v254, 2
    %v256 = vadd.f32 %v254, %v255
    %v257 = vrot.slane %v256, 1
    %v258 = vadd.f32 %v256, %v257
    %v259 = vmul.f32 %v249, 0.0625
    %v260 = vmul.f32 %v258, 0.0625
    %v261 = vmul.f32 %v259, %v259
    %v262 = vsub.f32 %v260, %v261
    %v263 = vsub.f32 %v235, %v259
    %v264 = vsub.f32 %v240, %v259
    %v265 = vadd.f32 %v262, 1e-05
    %v266 = vrsqrt.pop %v265
    %v267 = vmul.f32 %v263, %v266
    %v268 = vmul.f32 %v264, %v266
    %v269 = vmax.f32 %v267, 0.0
    %v270 = vmax.f32 %v268, 0.0
    %v272 = vlaneseq
    %v273 = vshrl.u32 %v272, 7
    %v274 = vsub.s32 0, %v273
    %v275 = vrot.slane %v79, %v274
    %277 = vmatprep.subr.mxu0 0.0
    %278 = vmatpush1.msra.mxu0 %v78
    %279 = vmatprep.subr.mxu0 0.0
    %280 = vmatpush1.msra.mxu0 %v77
    %281 = vmatprep.subr.mxu0 0.0
    %282 = vmatpush1.msra.mxu0 %v76
    %283 = vmatprep.subr.mxu0 0.0
    %284 = vmatpush1.msra.mxu0 %v75
    %285 = vmatprep.subr.mxu0 0.0
    %286 = vmatpush1.msra.mxu0 %v74
    %287 = vmatprep.subr.mxu0 0.0
    %288 = vmatpush1.msra.mxu0 %v73
    %289 = vmatprep.subr.mxu0 0.0
    %290 = vmatpush1.msra.mxu0 %v72
    %291 = vmatprep.subr.mxu0 0.0
    %292 = vmatpush1.msra.mxu0 %v71
    %293 = vmatprep.subr.mxu0 0.0
    %294 = vmatpush1.msra.mxu0 %v70
    %295 = vmatprep.subr.mxu0 0.0
    %296 = vmatpush1.msra.mxu0 %v69
    %297 = vmatprep.subr.mxu0 0.0
    %298 = vmatpush1.msra.mxu0 %v68
    %299 = vmatprep.subr.mxu0 0.0
    %300 = vmatpush1.msra.mxu0 %v67
    %301 = vmatprep.subr.mxu0 0.0
    %302 = vmatpush1.msra.mxu0 %v66
    %303 = vmatprep.subr.mxu0 0.0
    %304 = vmatpush1.msra.mxu0 %v65
    %305 = vmatprep.subr.mxu0 0.0
    %306 = vmatpush1.msra.mxu0 %v64
    %307 = vmatprep.subr.mxu0 0.0
    %308 = vmatpush1.msra.mxu0 %v63
    %309 = vmatprep.subr.mxu0 0.0
    %310 = vmatpush2.msra.mxu0 0.0
    %311 = vmatprep.subr.mxu0 0.0
    %312 = vmatpush2.msra.mxu0 0.0
    %313 = vmatprep.subr.mxu0 0.0
    %314 = vmatpush2.msra.mxu0 0.0
    %315 = vmatprep.subr.mxu0 0.0
    %316 = vmatpush2.msra.mxu0 0.0
    %317 = vmatprep.subr.mxu0 0.0
    %318 = vmatpush2.msra.mxu0 0.0
    %319 = vmatprep.subr.mxu0 0.0
    %320 = vmatpush2.msra.mxu0 0.0
    %321 = vmatprep.subr.mxu0 0.0
    %322 = vmatpush2.msra.mxu0 0.0
    %323 = vmatprep.subr.mxu0 0.0
    %324 = vmatpush2.msra.mxu0 0.0
    %325 = vmatprep.subr.mxu0 0.0
    %326 = vmatpush2.msra.mxu0 0.0
    %327 = vmatprep.subr.mxu0 0.0
    %328 = vmatpush2.msra.mxu0 0.0
    %329 = vmatprep.subr.mxu0 0.0
    %330 = vmatpush2.msra.mxu0 0.0
    %331 = vmatprep.subr.mxu0 0.0
    %332 = vmatpush2.msra.mxu0 0.0
    %333 = vmatprep.subr.mxu0 0.0
    %334 = vmatpush2.msra.mxu0 0.0
    %335 = vmatprep.subr.mxu0 0.0
    %336 = vmatpush2.msra.mxu0 0.0
    %337 = vmatprep.subr.mxu0 0.0
    %338 = vmatpush2.msra.mxu0 0.0
    %339 = vmatprep.subr.mxu0 0.0
    %340 = vmatpush2.msra.mxu0 0.0
    %341 = vmatprep.mubr.f32.mxu0 0.0
    %342 = vmatmul.mubr.f32.gmra.mxu0 %v269
    %v343 = vpop.f32.mrf.mxu0
    %v344 = vadd.f32 %v275, %v343
    %v345 = vpop.f32.mrf.mxu0
    %346 = vmatprep.mubr.f32.mxu0 0.0
    %347 = vmatmul.mubr.f32.gmra.mxu0 %v270
    %v348 = vpop.f32.mrf.mxu0
    %v349 = vadd.f32 %v275, %v348
    %v350 = vpop.f32.mrf.mxu0
    %351 = vdwg.mxu0
    %v352 = vadd.f32 %v344, %v349
    %v353 = vrot.slane %v352, 4
    %v354 = vadd.f32 %v352, %v353
    %v355 = vrot.slane %v354, 2
    %v356 = vadd.f32 %v354, %v355
    %v357 = vrot.slane %v356, 1
    %v358 = vadd.f32 %v356, %v357
    %v359 = vmul.f32 %v344, %v344
    %v360 = vmul.f32 %v349, %v349
    %v361 = vadd.f32 %v359, %v360
    %v362 = vrot.slane %v361, 4
    %v363 = vadd.f32 %v361, %v362
    %v364 = vrot.slane %v363, 2
    %v365 = vadd.f32 %v363, %v364
    %v366 = vrot.slane %v365, 1
    %v367 = vadd.f32 %v365, %v366
    %v368 = vmul.f32 %v358, 0.0625
    %v369 = vmul.f32 %v367, 0.0625
    %v370 = vmul.f32 %v368, %v368
    %v371 = vsub.f32 %v369, %v370
    %v372 = vsub.f32 %v344, %v368
    %v373 = vsub.f32 %v349, %v368
    %v374 = vadd.f32 %v371, 1e-05
    %v375 = vrsqrt.pop %v374
    %v376 = vmul.f32 %v372, %v375
    %v377 = vmul.f32 %v373, %v375
    %v378 = vmax.f32 %v376, 0.0
    %v379 = vmax.f32 %v377, 0.0
    %v380 = vld [vmem:[%s7] sm:$0xff]
    %v381 = vld [vmem:[%s7 + $0x8] sm:$0xff]
    %v382 = vld [vmem:[%s7 + $0x10] sm:$0xff]
    %v383 = vld [vmem:[%s7 + $0x18] sm:$0xff]
    %v384 = vld [vmem:[%s7 + $0x20] sm:$0xff]
    %v385 = vld [vmem:[%s7 + $0x28] sm:$0xff]
    %v386 = vld [vmem:[%s7 + $0x30] sm:$0xff]
    %v387 = vld [vmem:[%s7 + $0x38] sm:$0xff]
    %v388 = vld [vmem:[%s7 + $0x40] sm:$0xff]
    %v389 = vld [vmem:[%s7 + $0x48] sm:$0xff]
    %v390 = vld [vmem:[%s7 + $0x50] sm:$0xff]
    %v391 = vld [vmem:[%s7 + $0x58] sm:$0xff]
    %v392 = vld [vmem:[%s7 + $0x60] sm:$0xff]
    %v393 = vld [vmem:[%s7 + $0x68] sm:$0xff]
    %v394 = vld [vmem:[%s7 + $0x70] sm:$0xff]
    %v395 = vld [vmem:[%s7 + $0x78] sm:$0xff]
    %v396 = vld [vmem:[%s8] sm:$0x1]
    %v397 = vld [vmem:[%s9] sm:$0xff]
    %v398 = vld [vmem:[%s9 + $0x8] sm:$0xff]
    %v399 = vld [vmem:[%s9 + $0x10] sm:$0xff]
    %v400 = vld [vmem:[%s9 + $0x18] sm:$0xff]
    %v401 = vld [vmem:[%s9 + $0x20] sm:$0xff]
    %v402 = vld [vmem:[%s9 + $0x28] sm:$0xff]
    %v403 = vld [vmem:[%s9 + $0x30] sm:$0xff]
    %v404 = vld [vmem:[%s9 + $0x38] sm:$0xff]
    %v405 = vld [vmem:[%s9 + $0x40] sm:$0xff]
    %v406 = vld [vmem:[%s9 + $0x48] sm:$0xff]
    %v407 = vld [vmem:[%s9 + $0x50] sm:$0xff]
    %v408 = vld [vmem:[%s9 + $0x58] sm:$0xff]
    %v409 = vld [vmem:[%s9 + $0x60] sm:$0xff]
    %v410 = vld [vmem:[%s9 + $0x68] sm:$0xff]
    %v411 = vld [vmem:[%s9 + $0x70] sm:$0xff]
    %v412 = vld [vmem:[%s9 + $0x78] sm:$0xff]
    %v413 = vld [vmem:[%s10] sm:$0x1]
    %414 = vmatprep.subr.mxu0 0.0
    %415 = vmatpush1.msra.mxu0 0.0
    %416 = vmatprep.subr.mxu0 0.0
    %417 = vmatpush1.msra.mxu0 0.0
    %418 = vmatprep.subr.mxu0 0.0
    %419 = vmatpush1.msra.mxu0 0.0
    %420 = vmatprep.subr.mxu0 0.0
    %421 = vmatpush1.msra.mxu0 0.0
    %422 = vmatprep.subr.mxu0 0.0
    %423 = vmatpush1.msra.mxu0 0.0
    %424 = vmatprep.subr.mxu0 0.0
    %425 = vmatpush1.msra.mxu0 0.0
    %426 = vmatprep.subr.mxu0 0.0
    %427 = vmatpush1.msra.mxu0 0.0
    %428 = vmatprep.subr.mxu0 0.0
    %429 = vmatpush1.msra.mxu0 0.0
    %430 = vmatprep.subr.mxu0 0.0
    %431 = vmatpush1.msra.mxu0 0.0
    %432 = vmatprep.subr.mxu0 0.0
    %433 = vmatpush1.msra.mxu0 0.0
    %434 = vmatprep.subr.mxu0 0.0
    %435 = vmatpush1.msra.mxu0 0.0
    %436 = vmatprep.subr.mxu0 0.0
    %437 = vmatpush1.msra.mxu0 0.0
    %438 = vmatprep.subr.mxu0 0.0
    %439 = vmatpush1.msra.mxu0 0.0
    %440 = vmatprep.subr.mxu0 0.0
    %441 = vmatpush1.msra.mxu0 0.0
    %442 = vmatprep.subr.mxu0 0.0
    %443 = vmatpush1.msra.mxu0 %v379
    %444 = vmatprep.subr.mxu0 0.0
    %445 = vmatpush1.msra.mxu0 %v378
    %446 = vmatprep.subr.mxu0 0.0
    %447 = vmatpush2.msra.mxu0 0.0
    %448 = vmatprep.subr.mxu0 0.0
    %449 = vmatpush2.msra.mxu0 0.0
    %450 = vmatprep.subr.mxu0 0.0
    %451 = vmatpush2.msra.mxu0 0.0
    %452 = vmatprep.subr.mxu0 0.0
    %453 = vmatpush2.msra.mxu0 0.0
    %454 = vmatprep.subr.mxu0 0.0
    %455 = vmatpush2.msra.mxu0 0.0
    %456 = vmatprep.subr.mxu0 0.0
    %457 = vmatpush2.msra.mxu0 0.0
    %458 = vmatprep.subr.mxu0 0.0
    %459 = vmatpush2.msra.mxu0 0.0
    %460 = vmatprep.subr.mxu0 0.0
    %461 = vmatpush2.msra.mxu0 0.0
    %462 = vmatprep.subr.mxu0 0.0
    %463 = vmatpush2.msra.mxu0 0.0
    %464 = vmatprep.subr.mxu0 0.0
    %465 = vmatpush2.msra.mxu0 0.0
    %466 = vmatprep.subr.mxu0 0.0
    %467 = vmatpush2.msra.mxu0 0.0
    %468 = vmatprep.subr.mxu0 0.0
    %469 = vmatpush2.msra.mxu0 0.0
    %470 = vmatprep.subr.mxu0 0.0
    %471 = vmatpush2.msra.mxu0 0.0
    %472 = vmatprep.subr.mxu0 0.0
    %473 = vmatpush2.msra.mxu0 0.0
    %474 = vmatprep.subr.mxu0 0.0
    %475 = vmatpush2.msra.mxu0 0.0
    %476 = vmatprep.subr.mxu0 0.0
    %477 = vmatpush2.msra.mxu0 0.0
    %478 = vmatprep.mubr.f32.mxu0 0.0
    %479 = vmatmul.mubr.f32.gmra.mxu0 %v82
    %v480 = vpop.f32.mrf.mxu0
    %v481 = vadd.f32 0.0, %v480
    %v482 = vpop.f32.mrf.mxu0
    %483 = vmatprep.mubr.f32.mxu0 0.0
    %484 = vmatmul.mubr.f32.gmra.mxu0 %v85
    %v485 = vpop.f32.mrf.mxu0
    %v486 = vadd.f32 0.0, %v485
    %v487 = vpop.f32.mrf.mxu0
    %488 = vdwg.mxu0
    %v490 = vlaneseq
    %v491 = vshrl.u32 %v490, 7
    %v492 = vsub.s32 0, %v491
    %v493 = vrot.slane %v396, %v492
    %495 = vmatprep.subr.mxu0 0.0
    %496 = vmatpush1.msra.mxu0 %v395
    %497 = vmatprep.subr.mxu0 0.0
    %498 = vmatpush1.msra.mxu0 %v394
    %499 = vmatprep.subr.mxu0 0.0
    %500 = vmatpush1.msra.mxu0 %v393
    %501 = vmatprep.subr.mxu0 0.0
    %502 = vmatpush1.msra.mxu0 %v392
    %503 = vmatprep.subr.mxu0 0.0
    %504 = vmatpush1.msra.mxu0 %v391
    %505 = vmatprep.subr.mxu0 0.0
    %506 = vmatpush1.msra.mxu0 %v390
    %507 = vmatprep.subr.mxu0 0.0
    %508 = vmatpush1.msra.mxu0 %v389
    %509 = vmatprep.subr.mxu0 0.0
    %510 = vmatpush1.msra.mxu0 %v388
    %511 = vmatprep.subr.mxu0 0.0
    %512 = vmatpush1.msra.mxu0 %v387
    %513 = vmatprep.subr.mxu0 0.0
    %514 = vmatpush1.msra.mxu0 %v386
    %515 = vmatprep.subr.mxu0 0.0
    %516 = vmatpush1.msra.mxu0 %v385
    %517 = vmatprep.subr.mxu0 0.0
    %518 = vmatpush1.msra.mxu0 %v384
    %519 = vmatprep.subr.mxu0 0.0
    %520 = vmatpush1.msra.mxu0 %v383
    %521 = vmatprep.subr.mxu0 0.0
    %522 = vmatpush1.msra.mxu0 %v382
    %523 = vmatprep.subr.mxu0 0.0
    %524 = vmatpush1.msra.mxu0 %v381
    %525 = vmatprep.subr.mxu0 0.0
    %526 = vmatpush1.msra.mxu0 %v380
    %527 = vmatprep.subr.mxu0 0.0
    %528 = vmatpush2.msra.mxu0 0.0
    %529 = vmatprep.subr.mxu0 0.0
    %530 = vmatpush2.msra.mxu0 0.0
    %531 = vmatprep.subr.mxu0 0.0
    %532 = vmatpush2.msra.mxu0 0.0
    %533 = vmatprep.subr.mxu0 0.0
    %534 = vmatpush2.msra.mxu0 0.0
    %535 = vmatprep.subr.mxu0 0.0
    %536 = vmatpush2.msra.mxu0 0.0
    %537 = vmatprep.subr.mxu0 0.0
    %538 = vmatpush2.msra.mxu0 0.0
    %539 = vmatprep.subr.mxu0 0.0
    %540 = vmatpush2.msra.mxu0 0.0
    %541 = vmatprep.subr.mxu0 0.0
    %542 = vmatpush2.msra.mxu0 0.0
    %543 = vmatprep.subr.mxu0 0.0
    %544 = vmatpush2.msra.mxu0 0.0
    %545 = vmatprep.subr.mxu0 0.0
    %546 = vmatpush2.msra.mxu0 0.0
    %547 = vmatprep.subr.mxu0 0.0
    %548 = vmatpush2.msra.mxu0 0.0
    %549 = vmatprep.subr.mxu0 0.0
    %550 = vmatpush2.msra.mxu0 0.0
    %551 = vmatprep.subr.mxu0 0.0
    %552 = vmatpush2.msra.mxu0 0.0
    %553 = vmatprep.subr.mxu0 0.0
    %554 = vmatpush2.msra.mxu0 0.0
    %555 = vmatprep.subr.mxu0 0.0
    %556 = vmatpush2.msra.mxu0 0.0
    %557 = vmatprep.subr.mxu0 0.0
    %558 = vmatpush2.msra.mxu0 0.0
    %559 = vmatprep.mubr.f32.mxu0 0.0
    %560 = vmatmul.mubr.f32.gmra.mxu0 %v481
    %v561 = vpop.f32.mrf.mxu0
    %v562 = vadd.f32 %v493, %v561
    %v563 = vpop.f32.mrf.mxu0
    %564 = vmatprep.mubr.f32.mxu0 0.0
    %565 = vmatmul.mubr.f32.gmra.mxu0 %v486
    %v566 = vpop.f32.mrf.mxu0
    %v567 = vadd.f32 %v493, %v566
    %v568 = vpop.f32.mrf.mxu0
    %569 = vdwg.mxu0
    %v570 = vadd.f32 %v562, %v567
    %v571 = vrot.slane %v570, 4
    %v572 = vadd.f32 %v570, %v571
    %v573 = vrot.slane %v572, 2
    %v574 = vadd.f32 %v572, %v573
    %v575 = vrot.slane %v574, 1
    %v576 = vadd.f32 %v574, %v575
    %v577 = vmul.f32 %v562, %v562
    %v578 = vmul.f32 %v567, %v567
    %v579 = vadd.f32 %v577, %v578
    %v580 = vrot.slane %v579, 4
    %v581 = vadd.f32 %v579, %v580
    %v582 = vrot.slane %v581, 2
    %v583 = vadd.f32 %v581, %v582
    %v584 = vrot.slane %v583, 1
    %v585 = vadd.f32 %v583, %v584
    %v586 = vmul.f32 %v576, 0.0625
    %v587 = vmul.f32 %v585, 0.0625
    %v588 = vmul.f32 %v586, %v586
    %v589 = vsub.f32 %v587, %v588
    %v590 = vsub.f32 %v562, %v586
    %v591 = vsub.f32 %v567, %v586
    %v592 = vadd.f32 %v589, 1e-05
    %v593 = vrsqrt.pop %v592
    %v594 = vmul.f32 %v590, %v593
    %v595 = vmul.f32 %v591, %v593
    %v596 = vmax.f32 %v594, 0.0
    %v597 = vmax.f32 %v595, 0.0
    %v599 = vlaneseq
    %v600 = vshrl.u32 %v599, 7
    %v601 = vsub.s32 0, %v600
    %v602 = vrot.slane %v413, %v601
    %604 = vmatprep.subr.mxu0 0.0
    %605 = vmatpush1.msra.mxu0 %v412
    %606 = vmatprep.subr.mxu0 0.0
    %607 = vmatpush1.msra.mxu0 %v411
    %608 = vmatprep.subr.mxu0 0.0
    %609 = vmatpush1.msra.mxu0 %v410
    %610 = vmatprep.subr.mxu0 0.0
    %611 = vmatpush1.msra.mxu0 %v409
    %612 = vmatprep.subr.mxu0 0.0
    %613 = vmatpush1.msra.mxu0 %v408
    %614 = vmatprep.subr.mxu0 0.0
    %615 = vmatpush1.msra.mxu0 %v407
    %616 = vmatprep.subr.mxu0 0.0
    %617 = vmatpush1.msra.mxu0 %v406
    %618 = vmatprep.subr.mxu0 0.0
    %619 = vmatpush1.msra.mxu0 %v405
    %620 = vmatprep.subr.mxu0 0.0
    %621 = vmatpush1.msra.mxu0 %v404
    %622 = vmatprep.subr.mxu0 0.0
    %623 = vmatpush1.msra.mxu0 %v403
    %624 = vmatprep.subr.mxu0 0.0
    %625 = vmatpush1.msra.mxu0 %v402
    %626 = vmatprep.subr.mxu0 0.0
    %627 = vmatpush1.msra.mxu0 %v401
    %628 = vmatprep.subr.mxu0 0.0
    %629 = vmatpush1.msra.mxu0 %v400
    %630 = vmatprep.subr.mxu0 0.0
    %631 = vmatpush1.msra.mxu0 %v399
    %632 = vmatprep.subr.mxu0 0.0
    %633 = vmatpush1.msra.mxu0 %v398
    %634 = vmatprep.subr.mxu0 0.0
    %635 = vmatpush1.msra.mxu0 %v397
    %636 = vmatprep.subr.mxu0 0.0
    %637 = vmatpush2.msra.mxu0 0.0
    %638 = vmatprep.subr.mxu0 0.0
    %639 = vmatpush2.msra.mxu0 0.0
    %640 = vmatprep.subr.mxu0 0.0
    %641 = vmatpush2.msra.mxu0 0.0
    %642 = vmatprep.subr.mxu0 0.0
    %643 = vmatpush2.msra.mxu0 0.0
    %644 = vmatprep.subr.mxu0 0.0
    %645 = vmatpush2.msra.mxu0 0.0
    %646 = vmatprep.subr.mxu0 0.0
    %647 = vmatpush2.msra.mxu0 0.0
    %648 = vmatprep.subr.mxu0 0.0
    %649 = vmatpush2.msra.mxu0 0.0
    %650 = vmatprep.subr.mxu0 0.0
    %651 = vmatpush2.msra.mxu0 0.0
    %652 = vmatprep.subr.mxu0 0.0
    %653 = vmatpush2.msra.mxu0 0.0
    %654 = vmatprep.subr.mxu0 0.0
    %655 = vmatpush2.msra.mxu0 0.0
    %656 = vmatprep.subr.mxu0 0.0
    %657 = vmatpush2.msra.mxu0 0.0
    %658 = vmatprep.subr.mxu0 0.0
    %659 = vmatpush2.msra.mxu0 0.0
    %660 = vmatprep.subr.mxu0 0.0
    %661 = vmatpush2.msra.mxu0 0.0
    %662 = vmatprep.subr.mxu0 0.0
    %663 = vmatpush2.msra.mxu0 0.0
    %664 = vmatprep.subr.mxu0 0.0
    %665 = vmatpush2.msra.mxu0 0.0
    %666 = vmatprep.subr.mxu0 0.0
    %667 = vmatpush2.msra.mxu0 0.0
    %668 = vmatprep.mubr.f32.mxu0 0.0
    %669 = vmatmul.mubr.f32.gmra.mxu0 %v596
    %v670 = vpop.f32.mrf.mxu0
    %v671 = vadd.f32 %v602, %v670
    %v672 = vpop.f32.mrf.mxu0
    %673 = vmatprep.mubr.f32.mxu0 0.0
    %674 = vmatmul.mubr.f32.gmra.mxu0 %v597
    %v675 = vpop.f32.mrf.mxu0
    %v676 = vadd.f32 %v602, %v675
    %v677 = vpop.f32.mrf.mxu0
    %678 = vdwg.mxu0
    %v679 = vadd.f32 %v671, %v676
    %v680 = vrot.slane %v679, 4
    %v681 = vadd.f32 %v679, %v680
    %v682 = vrot.slane %v681, 2
    %v683 = vadd.f32 %v681, %v682
    %v684 = vrot.slane %v683, 1
    %v685 = vadd.f32 %v683, %v684
    %v686 = vmul.f32 %v671, %v671
    %v687 = vmul.f32 %v676, %v676
    %v688 = vadd.f32 %v686, %v687
    %v689 = vrot.slane %v688, 4
    %v690 = vadd.f32 %v688, %v689
    %v691 = vrot.slane %v690, 2
    %v692 = vadd.f32 %v690, %v691
    %v693 = vrot.slane %v692, 1
    %v694 = vadd.f32 %v692, %v693
    %v695 = vmul.f32 %v685, 0.0625
    %v696 = vmul.f32 %v694, 0.0625
    %v697 = vmul.f32 %v695, %v695
    %v698 = vsub.f32 %v696, %v697
    %v699 = vsub.f32 %v671, %v695
    %v700 = vsub.f32 %v676, %v695
    %v701 = vadd.f32 %v698, 1e-05
    %v702 = vrsqrt.pop %v701
    %v703 = vmul.f32 %v699, %v702
    %v704 = vmul.f32 %v700, %v702
    %v705 = vmax.f32 %v703, 0.0
    %v706 = vmax.f32 %v704, 0.0
    %707 = vst [vmem:[#allocation2] sm:$0xff] %v705
    %708 = vst [vmem:[#allocation2 + $0x8] sm:$0xff] %v706
    %v709 = vld [vmem:[%s2] sm:$0x3]
    %v711 = vsel %vm80, %v709, 0
    %713 = vmatprep.subr.mxu0 0.0
    %714 = vmatpush1.msra.mxu0 0.0
    %715 = vmatprep.subr.mxu0 0.0
    %716 = vmatpush1.msra.mxu0 0.0
    %717 = vmatprep.subr.mxu0 0.0
    %718 = vmatpush1.msra.mxu0 0.0
    %719 = vmatprep.subr.mxu0 0.0
    %720 = vmatpush1.msra.mxu0 0.0
    %721 = vmatprep.subr.mxu0 0.0
    %722 = vmatpush1.msra.mxu0 0.0
    %723 = vmatprep.subr.mxu0 0.0
    %724 = vmatpush1.msra.mxu0 0.0
    %725 = vmatprep.subr.mxu0 0.0
    %726 = vmatpush1.msra.mxu0 0.0
    %727 = vmatprep.subr.mxu0 0.0
    %728 = vmatpush1.msra.mxu0 0.0
    %729 = vmatprep.subr.mxu0 0.0
    %730 = vmatpush1.msra.mxu0 0.0
    %731 = vmatprep.subr.mxu0 0.0
    %732 = vmatpush1.msra.mxu0 0.0
    %733 = vmatprep.subr.mxu0 0.0
    %734 = vmatpush1.msra.mxu0 0.0
    %735 = vmatprep.subr.mxu0 0.0
    %736 = vmatpush1.msra.mxu0 0.0
    %737 = vmatprep.subr.mxu0 0.0
    %738 = vmatpush1.msra.mxu0 0.0
    %739 = vmatprep.subr.mxu0 0.0
    %740 = vmatpush1.msra.mxu0 0.0
    %741 = vmatprep.subr.mxu0 0.0
    %742 = vmatpush1.msra.mxu0 %v706
    %743 = vmatprep.subr.mxu0 0.0
    %744 = vmatpush1.msra.mxu0 %v705
    %745 = vmatprep.subr.mxu0 0.0
    %746 = vmatpush2.msra.mxu0 0.0
    %747 = vmatprep.subr.mxu0 0.0
    %748 = vmatpush2.msra.mxu0 0.0
    %749 = vmatprep.subr.mxu0 0.0
    %750 = vmatpush2.msra.mxu0 0.0
    %751 = vmatprep.subr.mxu0 0.0
    %752 = vmatpush2.msra.mxu0 0.0
    %753 = vmatprep.subr.mxu0 0.0
    %754 = vmatpush2.msra.mxu0 0.0
    %755 = vmatprep.subr.mxu0 0.0
    %756 = vmatpush2.msra.mxu0 0.0
    %757 = vmatprep.subr.mxu0 0.0
    %758 = vmatpush2.msra.mxu0 0.0
    %759 = vmatprep.subr.mxu0 0.0
    %760 = vmatpush2.msra.mxu0 0.0
    %761 = vmatprep.subr.mxu0 0.0
    %762 = vmatpush2.msra.mxu0 0.0
    %763 = vmatprep.subr.mxu0 0.0
    %764 = vmatpush2.msra.mxu0 0.0
    %765 = vmatprep.subr.mxu0 0.0
    %766 = vmatpush2.msra.mxu0 0.0
    %767 = vmatprep.subr.mxu0 0.0
    %768 = vmatpush2.msra.mxu0 0.0
    %769 = vmatprep.subr.mxu0 0.0
    %770 = vmatpush2.msra.mxu0 0.0
    %771 = vmatprep.subr.mxu0 0.0
    %772 = vmatpush2.msra.mxu0 0.0
    %773 = vmatprep.subr.mxu0 0.0
    %774 = vmatpush2.msra.mxu0 0.0
    %775 = vmatprep.subr.mxu0 0.0
    %776 = vmatpush2.msra.mxu0 0.0
    %777 = vmatprep.mubr.f32.mxu0 0.0
    %778 = vmatmul.mubr.f32.gmra.mxu0 %v711
    %v779 = vpop.f32.mrf.mxu0
    %v780 = vadd.f32 0.0, %v779
    %v781 = vpop.f32.mrf.mxu0
    %782 = vdwg.mxu0
    %783 = vst [vmem:[#allocation4] sm:$0x3] %v780
    // Predicated region
    $region46: #{encoder_forward.1} parent=1 // pred_check
      _
    $region47: #{encoder_forward.1} parent=1 // pred_check_branch
      %785 = sbr.rel (0) target = $region49
    $region48: #{encoder_forward.1} parent=1 // pred_region
      %s787 = ssub.s32 256, 256
      %788 = vsyncadd [#allocation3], %s787
      %s789 = sshll.u32 [#allocation2], 4
      %s790 = int_to_ptr.vmem [resolvable:$true] %s789
      %795 = dma.vmem_to_hbm [thread:$0]  %s790, 256, %s11, [#allocation3], 128, 128, 8
    $region49: #{encoder_forward.1} parent=1 // pred_fallthru
      _
    // Predicated region
    $region50: #{encoder_forward.1} parent=1 // pred_check
      _
    $region51: #{encoder_forward.1} parent=1 // pred_check_branch
      %797 = sbr.rel (0) target = $region53
    $region52: #{encoder_forward.1} parent=1 // pred_region
      %s799 = ssub.s32 32, 32
      %800 = vsyncadd [#allocation5], %s799
      %s802 = sshll.u32 [#allocation4], 4
      %s803 = int_to_ptr.vmem [resolvable:$true] %s802
      %805 = dma.vmem_to_hbm [thread:$0]  %s803, 32, %s12, [#allocation5]
    $region53: #{encoder_forward.1} parent=1 // pred_fallthru
      _
    // Predicated region
    $region54: #{encoder_forward.1} parent=1 // pred_check
      _
    $region55: #{encoder_forward.1} parent=1 // pred_check_branch
      %807 = sbr.rel (0) target = $region57
    $region56: #{encoder_forward.1} parent=1 // pred_region
      %808 = dma.done [#allocation3], 256
    $region57: #{encoder_forward.1} parent=1 // pred_fallthru
      _
    // Predicated region
    $region58: #{encoder_forward.1} parent=1 // pred_check
      _
    $region59: #{encoder_forward.1} parent=1 // pred_check_branch
      %810 = sbr.rel (0) target = $region61
    $region60: #{encoder_forward.1} parent=1 // pred_region
      %811 = dma.done [#allocation5], 32
    $region61: #{encoder_forward.1} parent=1 // pred_fallthru
      _
    %812 = vsyncpa [#allocation3], 1
    %813 = vsyncpa [#allocation5], 1

</llo_original>
